<compile_context>
chip_gen: v5e
topology: v5e:2x2
jax: 0.10.0
libtpu: 0.0.40
codegen_flags: <defaults>
</compile_context>

<pallas_src>
import functools

import jax
import jax.numpy as jnp
from jax.experimental import pallas as pl
from jax.experimental.pallas import tpu as pltpu

LN_EPS = 1e-5  # nn.LayerNorm default


def classifier_kernel(x_ref, w1_ref, hidvec_ref, w2_ref, bias2_ref, o_ref,
                      *, in_dim, hid_dim, matmul_dtype):
    # x tile: (TILE_B, IN_PAD), padded lanes (>= in_dim) are zero.
    x = x_ref[...].astype(jnp.float32)

    # ---- LayerNorm(in_dim): statistics over the TRUE in_dim ----
    inv_in = jnp.float32(1.0 / in_dim)
    s1 = jnp.sum(x, axis=-1, keepdims=True)
    s2 = jnp.sum(x * x, axis=-1, keepdims=True)
    mu = s1 * inv_in
    var = s2 * inv_in - mu * mu
    xn = (x - mu) * jax.lax.rsqrt(var + LN_EPS)
    # LN1 affine (gamma/beta) is folded into w1/bias1 in the wrapper.
    # Padded input lanes of xn are garbage, but the corresponding w1 rows are zero.

    # ---- weight_norm Linear(in_dim -> hid_dim) on the MXU ----
    h = jnp.dot(xn.astype(matmul_dtype), w1_ref[...],
                preferred_element_type=jnp.float32)
    hv = hidvec_ref[...].astype(jnp.float32)          # (3, HID_PAD): bias1_eff, ln2_g, ln2_b
    h = h + hv[0:1]                                   # padded hidden columns stay exactly 0

    # ---- LayerNorm(hid_dim): statistics over the TRUE hid_dim ----
    inv_h = jnp.float32(1.0 / hid_dim)
    t1 = jnp.sum(h, axis=-1, keepdims=True)
    t2 = jnp.sum(h * h, axis=-1, keepdims=True)
    mu2 = t1 * inv_h
    var2 = t2 * inv_h - mu2 * mu2
    hn = (h - mu2) * jax.lax.rsqrt(var2 + LN_EPS)
    hn = hn * hv[1:2] + hv[2:3]                       # gamma/beta are zero in padded cols -> hn padded = 0

    # ---- ReLU ----
    hn = jnp.maximum(hn, 0.0)

    # ---- Dropout ----
    # Eval mode is the identity.
    # TODO(synk): training-mode dropout mask via pltpu.prng_seed / pltpu.prng_random_bits.

    # ---- weight_norm Linear(hid_dim -> out_dim) on the MXU ----
    out = jnp.dot(hn.astype(matmul_dtype), w2_ref[...],
                  preferred_element_type=jnp.float32)
    out = out + bias2_ref[...].astype(jnp.float32)
    o_ref[...] = out.astype(o_ref.dtype)


def weight_norm_effective(v, g_scalar):
    # PyTorch weight_norm(dim=None): W = g * v / ||v||_F (g is a scalar).
    return g_scalar * v / jnp.sqrt(jnp.sum(v * v))


def _round_up(n, m):
    return ((n + m - 1) // m) * m


def _pad2(a, rows, cols):
    return jnp.pad(a, ((0, rows - a.shape[0]), (0, cols - a.shape[1])))


def simple_classifier(x, params, *, tile_b=128, matmul_dtype=jnp.float32):
    """x: (batch, in_dim) float32 -> (batch, out_dim) float32."""
    batch, in_dim = x.shape
    hid_dim = params["w1_v"].shape[0]   # PyTorch Linear weight is (out, in)
    out_dim = params["w2_v"].shape[0]

    # Lane-dense padded feature dims.
    IN_PAD = _round_up(in_dim, 128)
    HID_PAD = _round_up(hid_dim, 128)
    OUT_PAD = _round_up(out_dim, 128)

    # Batch tile: multiple of 8 sublanes; 128 rows by default (good on v5e/v6e/v7x).
    TILE_B = min(tile_b, _round_up(batch, 8))
    B_PAD = _round_up(batch, TILE_B)

    # Resolve weight_norm, transpose to (in, out), all in f32.
    w1 = weight_norm_effective(params["w1_v"], params["w1_g"]).T      # (in_dim, hid_dim)
    w2 = weight_norm_effective(params["w2_v"], params["w2_g"]).T      # (hid_dim, out_dim)

    # Fold LN1 affine into the first linear layer (exact, f32):
    #   (xn*g1 + b1) @ W1 + bias1 == xn @ (g1[:,None]*W1) + (b1 @ W1 + bias1)
    w1_eff = params["ln1_gamma"][:, None] * w1
    bias1_eff = params["ln1_beta"] @ w1 + params["b1"]

    # Pad everything (zeros in padded regions keep the math exact; see kernel comments).
    x_p = jnp.pad(x, ((0, B_PAD - batch), (0, IN_PAD - in_dim)))
    w1_p = _pad2(w1_eff, IN_PAD, HID_PAD).astype(matmul_dtype)
    w2_p = _pad2(w2, HID_PAD, OUT_PAD).astype(matmul_dtype)
    hidvec = jnp.stack([
        jnp.pad(bias1_eff, (0, HID_PAD - hid_dim)),
        jnp.pad(params["ln2_gamma"], (0, HID_PAD - hid_dim)),
        jnp.pad(params["ln2_beta"], (0, HID_PAD - hid_dim)),
    ]).astype(jnp.float32)                                            # (3, HID_PAD)
    bias2_p = jnp.pad(params["b2"], (0, OUT_PAD - out_dim)).reshape(1, OUT_PAD).astype(jnp.float32)

    kernel = functools.partial(classifier_kernel, in_dim=in_dim, hid_dim=hid_dim,
                               matmul_dtype=matmul_dtype)

    itemsize = jnp.dtype(matmul_dtype).itemsize
    flops = 2 * B_PAD * (IN_PAD * HID_PAD + HID_PAD * OUT_PAD)
    bytes_accessed = (B_PAD * IN_PAD * 4 + B_PAD * OUT_PAD * 4
                      + IN_PAD * HID_PAD * itemsize + HID_PAD * OUT_PAD * itemsize
                      + 3 * HID_PAD * 4 + OUT_PAD * 4)

    out_p = pl.pallas_call(
        kernel,
        out_shape=jax.ShapeDtypeStruct((B_PAD, OUT_PAD), jnp.float32),
        grid=(B_PAD // TILE_B,),
        in_specs=[
            pl.BlockSpec((TILE_B, IN_PAD), lambda i: (i, 0)),     # x: tiled over batch
            pl.BlockSpec((IN_PAD, HID_PAD), lambda i: (0, 0)),    # w1: VMEM-resident
            pl.BlockSpec((3, HID_PAD), lambda i: (0, 0)),         # bias1_eff / ln2 gamma / ln2 beta
            pl.BlockSpec((HID_PAD, OUT_PAD), lambda i: (0, 0)),   # w2: VMEM-resident
            pl.BlockSpec((1, OUT_PAD), lambda i: (0, 0)),         # bias2
        ],
        out_specs=pl.BlockSpec((TILE_B, OUT_PAD), lambda i: (i, 0)),
        compiler_params=pltpu.CompilerParams(
            dimension_semantics=("parallel",),                    # megacore / v7x 2-TC sharding
        ),
        cost_estimate=pl.CostEstimate(flops=flops,
                                      transcendentals=2 * B_PAD,
                                      bytes_accessed=bytes_accessed),
    )(x_p, w1_p, hidvec, w2_p, bias2_p)

    return out_p[:batch, :out_dim]


def init_params(key, in_dim, hid_dim, out_dim):
    ks = jax.random.split(key, 6)
    params = {
        "ln1_gamma": jnp.ones((in_dim,), jnp.float32),
        "ln1_beta": jnp.zeros((in_dim,), jnp.float32),
        "w1_v": jax.random.normal(ks[0], (hid_dim, in_dim), jnp.float32) * 0.1,
        "w1_g": jnp.float32(1.3),
        "b1": jax.random.normal(ks[1], (hid_dim,), jnp.float32) * 0.05,
        "ln2_gamma": jnp.ones((hid_dim,), jnp.float32),
        "ln2_beta": jnp.zeros((hid_dim,), jnp.float32),
        "w2_v": jax.random.normal(ks[2], (out_dim, hid_dim), jnp.float32) * 0.1,
        "w2_g": jnp.float32(0.9),
        "b2": jax.random.normal(ks[3], (out_dim,), jnp.float32) * 0.05,
    }
    return params


def reference_forward(x, params):
    # Pure-JAX reference mirroring the PyTorch module (eval mode).
    def ln(v, gamma, beta):
        mu = jnp.mean(v, axis=-1, keepdims=True)
        var = jnp.mean((v - mu) ** 2, axis=-1, keepdims=True)
        return (v - mu) / jnp.sqrt(var + LN_EPS) * gamma + beta

    w1 = weight_norm_effective(params["w1_v"], params["w1_g"])
    w2 = weight_norm_effective(params["w2_v"], params["w2_g"])
    h = ln(x, params["ln1_gamma"], params["ln1_beta"]) @ w1.T + params["b1"]
    h = jnp.maximum(ln(h, params["ln2_gamma"], params["ln2_beta"]), 0.0)
    return h @ w2.T + params["b2"]


if __name__ == "__main__":
    in_dim, hid_dim, out_dim = 32, 64, 16
    batch = 256  # multiple batch tiles -> exercises the pipelined, parallel grid

    key = jax.random.PRNGKey(0)
    kx, kp = jax.random.split(key)
    x = jax.random.normal(kx, (batch, in_dim), jnp.float32)
    params = init_params(kp, in_dim, hid_dim, out_dim)

    ref = reference_forward(x, params)

    # f32 MXU path (exact vs reference).
    out = jax.block_until_ready(simple_classifier(x, params, tile_b=128))
    assert out.shape == (batch, out_dim)
    assert jnp.allclose(out, ref, atol=1e-4, rtol=1e-4), "f32 mismatch vs reference"

    # bf16 MXU-input path (v6e/v7x production sizing); accumulation stays f32.
    out_bf16 = jax.block_until_ready(
        simple_classifier(x, params, tile_b=128, matmul_dtype=jnp.bfloat16))
    assert jnp.allclose(out_bf16, ref, atol=5e-2, rtol=5e-2), "bf16 mismatch vs reference"

    print("KERNEL_OK")
</pallas_src>

<mosaic_0001>
module attributes {stable_mosaic.version = 11 : i64} {
  func.func @classifier_kernel(%arg0: i32, %arg1: memref<128x128xf32, #tpu.memory_space<vmem>>, %arg2: memref<128x128xf32, #tpu.memory_space<vmem>>, %arg3: memref<3x128xf32, #tpu.memory_space<vmem>>, %arg4: memref<128x128xf32, #tpu.memory_space<vmem>>, %arg5: memref<1x128xf32, #tpu.memory_space<vmem>>, %arg6: memref<128x128xf32, #tpu.memory_space<vmem>>) attributes {dimension_semantics = [#tpu.dimension_semantics<parallel>], iteration_bounds = array<i64: 2>, scalar_prefetch = 0 : i64, scratch_operands = 0 : i64, tpu.core_type = #tpu.core_type<tc>, window_params = [{transform_indices = @transform_0, window_bounds = array<i64: 128, 128>}, {pipeline_mode = #tpu.pipeline_mode<synchronous>, transform_indices = @transform_1, window_bounds = array<i64: 128, 128>}, {pipeline_mode = #tpu.pipeline_mode<synchronous>, transform_indices = @transform_2, window_bounds = array<i64: 3, 128>}, {pipeline_mode = #tpu.pipeline_mode<synchronous>, transform_indices = @transform_3, window_bounds = array<i64: 128, 128>}, {pipeline_mode = #tpu.pipeline_mode<synchronous>, transform_indices = @transform_4, window_bounds = array<i64: 1, 128>}, {transform_indices = @transform_5, window_bounds = array<i64: 128, 128>}]} {
    %c0 = arith.constant 0 : index
    %c0_0 = arith.constant 0 : index
    %0 = vector.load %arg1[%c0, %c0_0] : memref<128x128xf32, #tpu.memory_space<vmem>>, vector<128x128xf32>
    %cst = arith.constant dense<0.000000e+00> : vector<128xf32>
    %1 = vector.multi_reduction <add>, %0, %cst [1] : vector<128x128xf32> to vector<128xf32>
    %2 = vector.shape_cast %1 : vector<128xf32> to vector<128x1xf32>
    %3 = arith.mulf %0, %0 : vector<128x128xf32>
    %cst_1 = arith.constant dense<0.000000e+00> : vector<128xf32>
    %4 = vector.multi_reduction <add>, %3, %cst_1 [1] : vector<128x128xf32> to vector<128xf32>
    %5 = vector.shape_cast %4 : vector<128xf32> to vector<128x1xf32>
    %cst_2 = arith.constant 3.125000e-02 : f32
    %6 = vector.broadcast %cst_2 : f32 to vector<128x1xf32>
    %7 = arith.mulf %2, %6 : vector<128x1xf32>
    %cst_3 = arith.constant 3.125000e-02 : f32
    %8 = vector.broadcast %cst_3 : f32 to vector<128x1xf32>
    %9 = arith.mulf %5, %8 : vector<128x1xf32>
    %10 = arith.mulf %7, %7 : vector<128x1xf32>
    %11 = arith.subf %9, %10 : vector<128x1xf32>
    %12 = vector.broadcast %7 : vector<128x1xf32> to vector<128x128xf32>
    %13 = arith.subf %0, %12 : vector<128x128xf32>
    %cst_4 = arith.constant 9.99999974E-6 : f32
    %14 = vector.broadcast %cst_4 : f32 to vector<128x1xf32>
    %15 = arith.addf %11, %14 : vector<128x1xf32>
    %16 = math.rsqrt %15 : vector<128x1xf32>
    %17 = vector.broadcast %16 : vector<128x1xf32> to vector<128x128xf32>
    %18 = arith.mulf %13, %17 : vector<128x128xf32>
    %c0_5 = arith.constant 0 : index
    %c0_6 = arith.constant 0 : index
    %19 = vector.load %arg2[%c0_5, %c0_6] : memref<128x128xf32, #tpu.memory_space<vmem>>, vector<128x128xf32>
    %cst_7 = arith.constant dense<0.000000e+00> : vector<128x128xf32>
    %20 = tpu.matmul %18, %19, %cst_7 {dimension_numbers = #tpu.dot_dimension_numbers<[1], [0], [0], [1], [0, 0, 1, 1], [], []>} : vector<128x128xf32>, vector<128x128xf32>, vector<128x128xf32> -> vector<128x128xf32>
    %c0_8 = arith.constant 0 : index
    %c0_9 = arith.constant 0 : index
    %21 = vector.load %arg3[%c0_8, %c0_9] : memref<3x128xf32, #tpu.memory_space<vmem>>, vector<3x128xf32>
    %22 = vector.extract_strided_slice %21 {offsets = [0, 0], sizes = [1, 128], strides = [1, 1]} : vector<3x128xf32> to vector<1x128xf32>
    %23 = vector.broadcast %22 : vector<1x128xf32> to vector<128x128xf32>
    %24 = arith.addf %20, %23 : vector<128x128xf32>
    %cst_10 = arith.constant dense<0.000000e+00> : vector<128xf32>
    %25 = vector.multi_reduction <add>, %24, %cst_10 [1] : vector<128x128xf32> to vector<128xf32>
    %26 = vector.shape_cast %25 : vector<128xf32> to vector<128x1xf32>
    %27 = arith.mulf %24, %24 : vector<128x128xf32>
    %cst_11 = arith.constant dense<0.000000e+00> : vector<128xf32>
    %28 = vector.multi_reduction <add>, %27, %cst_11 [1] : vector<128x128xf32> to vector<128xf32>
    %29 = vector.shape_cast %28 : vector<128xf32> to vector<128x1xf32>
    %cst_12 = arith.constant 1.562500e-02 : f32
    %30 = vector.broadcast %cst_12 : f32 to vector<128x1xf32>
    %31 = arith.mulf %26, %30 : vector<128x1xf32>
    %cst_13 = arith.constant 1.562500e-02 : f32
    %32 = vector.broadcast %cst_13 : f32 to vector<128x1xf32>
    %33 = arith.mulf %29, %32 : vector<128x1xf32>
    %34 = arith.mulf %31, %31 : vector<128x1xf32>
    %35 = arith.subf %33, %34 : vector<128x1xf32>
    %36 = vector.broadcast %31 : vector<128x1xf32> to vector<128x128xf32>
    %37 = arith.subf %24, %36 : vector<128x128xf32>
    %cst_14 = arith.constant 9.99999974E-6 : f32
    %38 = vector.broadcast %cst_14 : f32 to vector<128x1xf32>
    %39 = arith.addf %35, %38 : vector<128x1xf32>
    %40 = math.rsqrt %39 : vector<128x1xf32>
    %41 = vector.broadcast %40 : vector<128x1xf32> to vector<128x128xf32>
    %42 = arith.mulf %37, %41 : vector<128x128xf32>
    %43 = vector.extract_strided_slice %21 {offsets = [1, 0], sizes = [1, 128], strides = [1, 1]} : vector<3x128xf32> to vector<1x128xf32>
    %44 = vector.broadcast %43 : vector<1x128xf32> to vector<128x128xf32>
    %45 = arith.mulf %42, %44 : vector<128x128xf32>
    %46 = vector.extract_strided_slice %21 {offsets = [2, 0], sizes = [1, 128], strides = [1, 1]} : vector<3x128xf32> to vector<1x128xf32>
    %47 = vector.broadcast %46 : vector<1x128xf32> to vector<128x128xf32>
    %48 = arith.addf %45, %47 : vector<128x128xf32>
    %cst_15 = arith.constant 0.000000e+00 : f32
    %49 = vector.broadcast %cst_15 : f32 to vector<128x128xf32>
    %50 = arith.maximumf %48, %49 : vector<128x128xf32>
    %c0_16 = arith.constant 0 : index
    %c0_17 = arith.constant 0 : index
    %51 = vector.load %arg4[%c0_16, %c0_17] : memref<128x128xf32, #tpu.memory_space<vmem>>, vector<128x128xf32>
    %cst_18 = arith.constant dense<0.000000e+00> : vector<128x128xf32>
    %52 = tpu.matmul %50, %51, %cst_18 {dimension_numbers = #tpu.dot_dimension_numbers<[1], [0], [0], [1], [0, 0, 1, 1], [], []>} : vector<128x128xf32>, vector<128x128xf32>, vector<128x128xf32> -> vector<128x128xf32>
    %c0_19 = arith.constant 0 : index
    %c0_20 = arith.constant 0 : index
    %53 = vector.load %arg5[%c0_19, %c0_20] : memref<1x128xf32, #tpu.memory_space<vmem>>, vector<1x128xf32>
    %54 = vector.broadcast %53 : vector<1x128xf32> to vector<128x128xf32>
    %55 = arith.addf %52, %54 : vector<128x128xf32>
    %c0_21 = arith.constant 0 : index
    %c0_22 = arith.constant 0 : index
    %56 = vector.load %arg6[%c0_21, %c0_22] : memref<128x128xf32, #tpu.memory_space<vmem>>, vector<128x128xf32>
    tpu.vector_store %arg6[%c0_21, %c0_22], %55 {strides = array<i32>} : memref<128x128xf32, #tpu.memory_space<vmem>>, vector<128x128xf32>,
    return
  }
  func.func @transform_0(%arg0: i32) -> (i32, i32) {
    %c0_i32 = arith.constant 0 : i32
    %c0_i32_0 = arith.constant 0 : i32
    return %arg0, %c0_i32 : i32, i32
  }
  func.func @transform_1(%arg0: i32) -> (i32, i32) {
    %c0_i32 = arith.constant 0 : i32
    %c0_i32_0 = arith.constant 0 : i32
    %c0_i32_1 = arith.constant 0 : i32
    return %c0_i32, %c0_i32_0 : i32, i32
  }
  func.func @transform_2(%arg0: i32) -> (i32, i32) {
    %c0_i32 = arith.constant 0 : i32
    %c0_i32_0 = arith.constant 0 : i32
    %c0_i32_1 = arith.constant 0 : i32
    return %c0_i32, %c0_i32_0 : i32, i32
  }
  func.func @transform_3(%arg0: i32) -> (i32, i32) {
    %c0_i32 = arith.constant 0 : i32
    %c0_i32_0 = arith.constant 0 : i32
    %c0_i32_1 = arith.constant 0 : i32
    return %c0_i32, %c0_i32_0 : i32, i32
  }
  func.func @transform_4(%arg0: i32) -> (i32, i32) {
    %c0_i32 = arith.constant 0 : i32
    %c0_i32_0 = arith.constant 0 : i32
    %c0_i32_1 = arith.constant 0 : i32
    return %c0_i32, %c0_i32_0 : i32, i32
  }
  func.func @transform_5(%arg0: i32) -> (i32, i32) {
    %c0_i32 = arith.constant 0 : i32
    %c0_i32_0 = arith.constant 0 : i32
    return %arg0, %c0_i32 : i32, i32
  }
}

</mosaic_0001>

<llo_original>
// kernel: tpu_custom_call.1
$region0: #{tpu_custom_call.1}
  #allocation0 [shape = 'u32[]', space=smem, size = 0x4, offset = 0x4, fixed_abs, tag = 'smem constant byte address 0x4 - core index']
  #allocation1 [shape = 'u32[72,128]{1,0:T(1,128)}', space=vmem, size = 0x9000, scoped, tag = 'internal scratch']
  %s0 = inlined_call_operand.hbm [shape: f32[256,128], index: 0, kind: input, shape index: {}]
  %s1 = inlined_call_operand.hbm [shape: f32[128,128], index: 1, kind: input, shape index: {}]
  %s2 = inlined_call_operand.hbm [shape: f32[3,128], index: 2, kind: input, shape index: {}]
  %s3 = inlined_call_operand.hbm [shape: f32[128,128], index: 3, kind: input, shape index: {}]
  %s4 = inlined_call_operand.vmem [shape: f32[1,128], index: 4, kind: input, shape index: {}]
  %s5 = inlined_call_operand.hbm [shape: f32[256,128], index: 5, kind: output, shape index: {}]
  %s6 = sld [smem:[#allocation0]]
  $region69: #{tpu_custom_call.1} parent=0
    _
  %s8 = ssub.s32 1, %s6
  %s9 = scalar_select 0, %s8, %s6
  $region1: #{tpu_custom_call.1} parent=0
    #allocation2 [shape = 'u8[131072]{0}', space=vmem, size = 0x20000, scoped, tag = 'input window, operand 0']
    #allocation3 [shape = 's32[2]{0}', space=sflag, size = 0x8, scoped, tag = 'scoped memory for tpu_custom_call.1']
    #allocation4 [shape = 's32[2]{0}', space=sflag, size = 0x8, scoped, tag = 'scoped memory for tpu_custom_call.1']
    #allocation5 [shape = 'u8[65536]{0}', space=vmem, size = 0x10000, scoped, tag = 'input window, operand 1, single buffered']
    #allocation6 [shape = 's32[1]{0}', space=sflag, size = 0x4, scoped, tag = 'scoped memory for tpu_custom_call.1']
    #allocation7 [shape = 'u8[2048]{0}', space=vmem, size = 0x800, scoped, tag = 'input window, operand 2, single buffered']
    #allocation8 [shape = 'u8[65536]{0}', space=vmem, size = 0x10000, scoped, tag = 'input window, operand 3, single buffered']
    #allocation9 [shape = 's32[1]{0}', space=sflag, size = 0x4, scoped, tag = 'scoped memory for tpu_custom_call.1']
    #allocation10 [shape = 'u8[131072]{0}', space=vmem, size = 0x20000, scoped, tag = 'output window, operand 0']
    %10 = vsyncpa [#allocation3], 0
    %s11 = scalar_lea.sflag [#allocation3], 1
    %12 = vsyncpa %s11, 0
    %13 = vsyncpa [#allocation6], 0
    %14 = vsyncpa [#allocation9], 0
    %15 = vsyncpa [#allocation4], 0
    %s16 = scalar_lea.sflag [#allocation4], 1
    %17 = vsyncpa %s16, 0
    loop: start=0, step=1, limit=4
    $region2: #{tpu_custom_call.1} parent=1 // loop_pre_header
      _
    $region3: #{tpu_custom_call.1} parent=1 // loop_header
      %s19 = sphi 0, %s23
      %p20 = scmp.ge.s32.totalorder %s19, 4
      %s29 = sphi 0, %s31
      %s32 = sphi 0, %s29
      %s33 = sphi 0, %s32
      %s49 = sphi 0, %s33
      %s53 = sphi 0, %s53
      %s55 = sphi 0, %s53
      %s56 = sphi 0, %s55
      %s70 = sphi 0, %s56
      %s74 = sphi 0, %s74
      %s76 = sphi 0, %s74
      %s77 = sphi 0, %s76
      %s91 = sphi 0, %s77
      %s95 = sphi 0, %s95
      %s97 = sphi 0, %s95
      %s98 = sphi 0, %s97
      %s112 = sphi 0, %s98
      %s116 = sphi 0, %s116
      %s118 = sphi 0, %s116
      %s119 = sphi 0, %s118
      %s133 = sphi 0, %s119
      %s139 = sphi 0, %s141
      %s142 = sphi 0, %s139
      %s143 = sphi 0, %s142
      %s159 = sphi 0, %s143
    $region4: #{tpu_custom_call.1} parent=1 // loop_header_branch
      %22 = sbr.rel (%p20) target = $region8
    $region5: #{tpu_custom_call.1} parent=1 // loop_body
      %s24 = ssub.s32 %s19, 1
      %s25 = ssub.s32 %s19, 2
      %s26 = sadd.s32 %s19, 1
      %s27 = ssub.s32 %s19, %s26
      %p28 = scmp.eq.s32.totalorder %s27, 0
      %s30 = sadd.s32 %s29, 1
      %s31 = scalar_select %p28, %s29, %s30
      %p34 = pneg %p28
      %p35 = scmp.eq.s32.totalorder %s19, 1
      %p36 = por %p34, %p35
      %p37 = scmp.ne.s32.totalorder %s29, %s32
      %p38 = scmp.eq.s32.totalorder %s19, 0
      %p39 = por %p37, %p38
      %p40 = scmp.ne.s32.totalorder %s29, %s32
      %p41 = scmp.eq.s32.totalorder %s24, 1
      %p42 = por %p40, %p41
      %p43 = scmp.ne.s32.totalorder %s32, %s33
      %p44 = scmp.eq.s32.totalorder %s24, 0
      %p45 = por %p43, %p44
      %p46 = scmp.ne.s32.totalorder %s32, %s33
      %p47 = scmp.eq.s32.totalorder %s25, 1
      %p48 = por %p46, %p47
      %p50 = scmp.ne.s32.totalorder %s33, %s49
      %p51 = scmp.eq.s32.totalorder %s25, 0
      %p52 = por %p50, %p51
      %s54 = sadd.s32 %s53, 1
      %p57 = scmp.eq.s32.totalorder %s19, 1
      %p58 = scmp.ne.s32.totalorder %s53, %s55
      %p59 = scmp.eq.s32.totalorder %s19, 0
      %p60 = por %p58, %p59
      %p61 = scmp.ne.s32.totalorder %s53, %s55
      %p62 = scmp.eq.s32.totalorder %s24, 1
      %p63 = por %p61, %p62
      %p64 = scmp.ne.s32.totalorder %s55, %s56
      %p65 = scmp.eq.s32.totalorder %s24, 0
      %p66 = por %p64, %p65
      %p67 = scmp.ne.s32.totalorder %s55, %s56
      %p68 = scmp.eq.s32.totalorder %s25, 1
      %p69 = por %p67, %p68
      %p71 = scmp.ne.s32.totalorder %s56, %s70
      %p72 = scmp.eq.s32.totalorder %s25, 0
      %p73 = por %p71, %p72
      %s75 = sadd.s32 %s74, 1
      %p78 = scmp.eq.s32.totalorder %s19, 1
      %p79 = scmp.ne.s32.totalorder %s74, %s76
      %p80 = scmp.eq.s32.totalorder %s19, 0
      %p81 = por %p79, %p80
      %p82 = scmp.ne.s32.totalorder %s74, %s76
      %p83 = scmp.eq.s32.totalorder %s24, 1
      %p84 = por %p82, %p83
      %p85 = scmp.ne.s32.totalorder %s76, %s77
      %p86 = scmp.eq.s32.totalorder %s24, 0
      %p87 = por %p85, %p86
      %p88 = scmp.ne.s32.totalorder %s76, %s77
      %p89 = scmp.eq.s32.totalorder %s25, 1
      %p90 = por %p88, %p89
      %p92 = scmp.ne.s32.totalorder %s77, %s91
      %p93 = scmp.eq.s32.totalorder %s25, 0
      %p94 = por %p92, %p93
      %s96 = sadd.s32 %s95, 1
      %p99 = scmp.eq.s32.totalorder %s19, 1
      %p100 = scmp.ne.s32.totalorder %s95, %s97
      %p101 = scmp.eq.s32.totalorder %s19, 0
      %p102 = por %p100, %p101
      %p103 = scmp.ne.s32.totalorder %s95, %s97
      %p104 = scmp.eq.s32.totalorder %s24, 1
      %p105 = por %p103, %p104
      %p106 = scmp.ne.s32.totalorder %s97, %s98
      %p107 = scmp.eq.s32.totalorder %s24, 0
      %p108 = por %p106, %p107
      %p109 = scmp.ne.s32.totalorder %s97, %s98
      %p110 = scmp.eq.s32.totalorder %s25, 1
      %p111 = por %p109, %p110
      %p113 = scmp.ne.s32.totalorder %s98, %s112
      %p114 = scmp.eq.s32.totalorder %s25, 0
      %p115 = por %p113, %p114
      %s117 = sadd.s32 %s116, 1
      %p120 = scmp.eq.s32.totalorder %s19, 1
      %p121 = scmp.ne.s32.totalorder %s116, %s118
      %p122 = scmp.eq.s32.totalorder %s19, 0
      %p123 = por %p121, %p122
      %p124 = scmp.ne.s32.totalorder %s116, %s118
      %p125 = scmp.eq.s32.totalorder %s24, 1
      %p126 = por %p124, %p125
      %p127 = scmp.ne.s32.totalorder %s118, %s119
      %p128 = scmp.eq.s32.totalorder %s24, 0
      %p129 = por %p127, %p128
      %p130 = scmp.ne.s32.totalorder %s118, %s119
      %p131 = scmp.eq.s32.totalorder %s25, 1
      %p132 = por %p130, %p131
      %p134 = scmp.ne.s32.totalorder %s119, %s133
      %p135 = scmp.eq.s32.totalorder %s25, 0
      %p136 = por %p134, %p135
      %s137 = ssub.s32 %s19, %s26
      %p138 = scmp.eq.s32.totalorder %s137, 0
      %s140 = sadd.s32 %s139, 1
      %s141 = scalar_select %p138, %s139, %s140
      %p144 = pneg %p138
      %p145 = scmp.eq.s32.totalorder %s19, 1
      %p146 = por %p144, %p145
      %p147 = scmp.ne.s32.totalorder %s139, %s142
      %p148 = scmp.eq.s32.totalorder %s19, 0
      %p149 = por %p147, %p148
      %p150 = scmp.ne.s32.totalorder %s139, %s142
      %p151 = scmp.eq.s32.totalorder %s24, 1
      %p152 = por %p150, %p151
      %p153 = scmp.ne.s32.totalorder %s142, %s143
      %p154 = scmp.eq.s32.totalorder %s24, 0
      %p155 = por %p153, %p154
      %p156 = scmp.ne.s32.totalorder %s142, %s143
      %p157 = scmp.eq.s32.totalorder %s25, 1
      %p158 = por %p156, %p157
      %p160 = scmp.ne.s32.totalorder %s143, %s159
      %p161 = scmp.eq.s32.totalorder %s25, 0
      %p162 = por %p160, %p161
      %p163 = scmp.le.s32.totalorder 1, %s19
      %p164 = scmp.lt.s32.totalorder %s19, 3
      %p165 = pnand %p163, %p164
      %p166 = pneg %p165
      // Predicated region
      $region9: #{tpu_custom_call.1} parent=5 // pred_check
        _
      $region10: #{tpu_custom_call.1} parent=5 // pred_check_branch
        %168 = sbr.rel (%p165) target = $region12
      $region11: #{tpu_custom_call.1} parent=5 // pred_region
        %s169 = ssub.s32 %s19, 1
        // Predicated region
        $region13: #{tpu_custom_call.1} parent=11 // pred_check
          %p170 = pneg %p66
        $region14: #{tpu_custom_call.1} parent=11 // pred_check_branch
          %172 = sbr.rel (%p170) target = $region16
        $region15: #{tpu_custom_call.1} parent=11 // pred_region
          %174 = vsyncadd [#allocation6], 0
          %s175 = sshll.u32 %s1, 4
          %s176 = int_to_ptr.hbm [resolvable:$true] %s175
          %s177 = sshll.u32 [#allocation5], 4
          %s178 = int_to_ptr.vmem [resolvable:$true] %s177
          %183 = dma.hbm_to_vmem [thread:$0]  %s176, 2048, %s178, [#allocation6], 128, 128, 8
        $region16: #{tpu_custom_call.1} parent=11 // pred_fallthru
          _
        // Predicated region
        $region17: #{tpu_custom_call.1} parent=11 // pred_check
          %p184 = pneg %p87
        $region18: #{tpu_custom_call.1} parent=11 // pred_check_branch
          %186 = sbr.rel (%p184) target = $region20
        $region19: #{tpu_custom_call.1} parent=11 // pred_region
          %188 = vsyncadd [#allocation6], 0
          %s190 = sshll.u32 %s2, 4
          %s191 = int_to_ptr.hbm [resolvable:$true] %s190
          %s192 = sshll.u32 [#allocation7], 4
          %s193 = int_to_ptr.vmem [resolvable:$true] %s192
          %195 = dma.hbm_to_vmem [thread:$0]  %s191, 64, %s193, [#allocation6]
        $region20: #{tpu_custom_call.1} parent=11 // pred_fallthru
          _
        // Predicated region
        $region21: #{tpu_custom_call.1} parent=11 // pred_check
          %p196 = pneg %p108
        $region22: #{tpu_custom_call.1} parent=11 // pred_check_branch
          %198 = sbr.rel (%p196) target = $region24
        $region23: #{tpu_custom_call.1} parent=11 // pred_region
          %200 = vsyncadd [#allocation9], 0
          %s201 = sshll.u32 %s3, 4
          %s202 = int_to_ptr.hbm [resolvable:$true] %s201
          %s203 = sshll.u32 [#allocation8], 4
          %s204 = int_to_ptr.vmem [resolvable:$true] %s203
          %209 = dma.hbm_to_vmem [thread:$0]  %s202, 2048, %s204, [#allocation9], 128, 128, 8
        $region24: #{tpu_custom_call.1} parent=11 // pred_fallthru
          _
        // Predicated region
        $region25: #{tpu_custom_call.1} parent=11 // pred_check
          %p210 = pneg %p129
        $region26: #{tpu_custom_call.1} parent=11 // pred_check_branch
          %212 = sbr.rel (%p210) target = $region28
        $region27: #{tpu_custom_call.1} parent=11 // pred_region
          _
        $region28: #{tpu_custom_call.1} parent=11 // pred_fallthru
          _
      $region12: #{tpu_custom_call.1} parent=5 // pred_fallthru
        _
      %p213 = scmp.lt.s32.totalorder %s19, 2
      // Predicated region
      $region29: #{tpu_custom_call.1} parent=5 // pred_check
        %p214 = pneg %p213
      $region30: #{tpu_custom_call.1} parent=5 // pred_check_branch
        %216 = sbr.rel (%p214) target = $region32
      $region31: #{tpu_custom_call.1} parent=5 // pred_region
        // Predicated region
        $region33: #{tpu_custom_call.1} parent=31 // pred_check
          %p217 = pneg %p39
        $region34: #{tpu_custom_call.1} parent=31 // pred_check_branch
          %219 = sbr.rel (%p217) target = $region36
        $region35: #{tpu_custom_call.1} parent=31 // pred_region
          %s220 = sand.u32 %s29, 1
          %s221 = scalar_lea.sflag [#allocation3], %s220
          %s222 = sand.u32 %s29, 1
          %s223 = smul.addr %s222, 128
          %s224 = scalar_lea.vmem [#allocation2], %s223
          %s225 = smul.u32 16, %s19
          %227 = vsyncadd %s221, 0
          %s228 = smul.addr %s225, 8
          %s229 = scalar_lea.hbm %s0, %s228
          %s230 = sshll.u32 %s229, 4
          %s231 = int_to_ptr.hbm [resolvable:$true] %s230
          %s232 = sshll.u32 %s224, 4
          %s233 = int_to_ptr.vmem [resolvable:$true] %s232
          %238 = dma.hbm_to_vmem [thread:$0]  %s231, 2048, %s233, %s221, 128, 128, 8
        $region36: #{tpu_custom_call.1} parent=31 // pred_fallthru
          _
      $region32: #{tpu_custom_call.1} parent=5 // pred_fallthru
        _
      %p239 = scmp.le.s32.totalorder 1, %s19
      %p240 = scmp.lt.s32.totalorder %s19, 3
      %p241 = pnand %p239, %p240
      %p242 = pneg %p241
      // Predicated region
      $region37: #{tpu_custom_call.1} parent=5 // pred_check
        _
      $region38: #{tpu_custom_call.1} parent=5 // pred_check_branch
        %244 = sbr.rel (%p241) target = $region40
      $region39: #{tpu_custom_call.1} parent=5 // pred_region
        %s245 = ssub.s32 %s19, 1
        %s246 = sand.u32 %s32, 1
        %s247 = scalar_lea.sflag [#allocation3], %s246
        %s248 = sand.u32 %s32, 1
        %s249 = smul.addr %s248, 128
        %s250 = scalar_lea.vmem [#allocation2], %s249
        // Predicated region
        $region41: #{tpu_custom_call.1} parent=39 // pred_check
          %p251 = pneg %p45
        $region42: #{tpu_custom_call.1} parent=39 // pred_check_branch
          %253 = sbr.rel (%p251) target = $region44
        $region43: #{tpu_custom_call.1} parent=39 // pred_region
          %255 = dma.done %s247, 2048
        $region44: #{tpu_custom_call.1} parent=39 // pred_fallthru
          _
        // Predicated region
        $region45: #{tpu_custom_call.1} parent=39 // pred_check
          %p256 = pneg %p66
        $region46: #{tpu_custom_call.1} parent=39 // pred_check_branch
          %258 = sbr.rel (%p256) target = $region48
        $region47: #{tpu_custom_call.1} parent=39 // pred_region
          %260 = dma.done [#allocation6], 2048
        $region48: #{tpu_custom_call.1} parent=39 // pred_fallthru
          _
        // Predicated region
        $region49: #{tpu_custom_call.1} parent=39 // pred_check
          %p261 = pneg %p87
        $region50: #{tpu_custom_call.1} parent=39 // pred_check_branch
          %263 = sbr.rel (%p261) target = $region52
        $region51: #{tpu_custom_call.1} parent=39 // pred_region
          %265 = dma.done [#allocation6], 64
        $region52: #{tpu_custom_call.1} parent=39 // pred_fallthru
          _
        // Predicated region
        $region53: #{tpu_custom_call.1} parent=39 // pred_check
          %p266 = pneg %p108
        $region54: #{tpu_custom_call.1} parent=39 // pred_check_branch
          %268 = sbr.rel (%p266) target = $region56
        $region55: #{tpu_custom_call.1} parent=39 // pred_region
          %270 = dma.done [#allocation9], 2048
        $region56: #{tpu_custom_call.1} parent=39 // pred_fallthru
          _
        %s271 = sand.u32 %s32, 1
        %s272 = scalar_lea.sflag [#allocation3], %s271
        %s273 = sand.u32 %s32, 1
        %s274 = smul.addr %s273, 128
        %s275 = scalar_lea.vmem [#allocation2], %s274
        %p276 = pneg %p45
        %p277 = pneg %p42
        %p278 = pneg %p66
        %p279 = pneg %p63
        %p280 = pneg %p87
        %p281 = pneg %p84
        %p282 = pneg %p108
        %p283 = pneg %p105
        %p284 = pneg %p129
        %p285 = pneg %p126
        %p286 = pneg %p155
        %p287 = pneg %p152
        %s288 = sand.u32 %s142, 1
        %s289 = scalar_lea.sflag [#allocation4], %s288
        %s290 = sand.u32 %s142, 1
        %s291 = smul.addr %s290, 128
        %s292 = scalar_lea.vmem [#allocation10], %s291
        %s293 = smul.u32 16, %s24
        %s294 = smul.u32 16, %s24
        %v295 = vld [vmem:[%s250] sm:$0xff]
        %v296 = vld [vmem:[%s250 + $0x8] sm:$0xff]
        %v297 = vld [vmem:[%s250 + $0x10] sm:$0xff]
        %v298 = vld [vmem:[%s250 + $0x18] sm:$0xff]
        %v299 = vld [vmem:[%s250 + $0x20] sm:$0xff]
        %v300 = vld [vmem:[%s250 + $0x28] sm:$0xff]
        %v301 = vld [vmem:[%s250 + $0x30] sm:$0xff]
        %v302 = vld [vmem:[%s250 + $0x38] sm:$0xff]
        %v303 = vld [vmem:[%s250 + $0x40] sm:$0xff]
        %v304 = vld [vmem:[%s250 + $0x48] sm:$0xff]
        %v305 = vld [vmem:[%s250 + $0x50] sm:$0xff]
        %v306 = vld [vmem:[%s250 + $0x58] sm:$0xff]
        %v307 = vld [vmem:[%s250 + $0x60] sm:$0xff]
        %v308 = vld [vmem:[%s250 + $0x68] sm:$0xff]
        %v309 = vld [vmem:[%s250 + $0x70] sm:$0xff]
        %v310 = vld [vmem:[%s250 + $0x78] sm:$0xff]
        %311 = vadd.xlane.f32.xlu0 %v295
        %v312 = vpop.xlane.xlu0 %311
        %313 = vadd.xlane.f32.xlu0 %v296
        %v314 = vpop.xlane.xlu0 %313
        %315 = vadd.xlane.f32.xlu0 %v297
        %v316 = vpop.xlane.xlu0 %315
        %317 = vadd.xlane.f32.xlu0 %v298
        %v318 = vpop.xlane.xlu0 %317
        %319 = vadd.xlane.f32.xlu0 %v299
        %v320 = vpop.xlane.xlu0 %319
        %321 = vadd.xlane.f32.xlu0 %v300
        %v322 = vpop.xlane.xlu0 %321
        %323 = vadd.xlane.f32.xlu0 %v301
        %v324 = vpop.xlane.xlu0 %323
        %325 = vadd.xlane.f32.xlu0 %v302
        %v326 = vpop.xlane.xlu0 %325
        %327 = vadd.xlane.f32.xlu0 %v303
        %v328 = vpop.xlane.xlu0 %327
        %329 = vadd.xlane.f32.xlu0 %v304
        %v330 = vpop.xlane.xlu0 %329
        %331 = vadd.xlane.f32.xlu0 %v305
        %v332 = vpop.xlane.xlu0 %331
        %333 = vadd.xlane.f32.xlu0 %v306
        %v334 = vpop.xlane.xlu0 %333
        %335 = vadd.xlane.f32.xlu0 %v307
        %v336 = vpop.xlane.xlu0 %335
        %337 = vadd.xlane.f32.xlu0 %v308
        %v338 = vpop.xlane.xlu0 %337
        %339 = vadd.xlane.f32.xlu0 %v309
        %v340 = vpop.xlane.xlu0 %339
        %341 = vadd.xlane.f32.xlu0 %v310
        %v342 = vpop.xlane.xlu0 %341
        %v343 = vmul.f32 %v295, %v295
        %v344 = vmul.f32 %v296, %v296
        %v345 = vmul.f32 %v297, %v297
        %v346 = vmul.f32 %v298, %v298
        %v347 = vmul.f32 %v299, %v299
        %v348 = vmul.f32 %v300, %v300
        %v349 = vmul.f32 %v301, %v301
        %v350 = vmul.f32 %v302, %v302
        %v351 = vmul.f32 %v303, %v303
        %v352 = vmul.f32 %v304, %v304
        %v353 = vmul.f32 %v305, %v305
        %v354 = vmul.f32 %v306, %v306
        %v355 = vmul.f32 %v307, %v307
        %v356 = vmul.f32 %v308, %v308
        %v357 = vmul.f32 %v309, %v309
        %v358 = vmul.f32 %v310, %v310
        %359 = vadd.xlane.f32.xlu0 %v343
        %v360 = vpop.xlane.xlu0 %359
        %361 = vadd.xlane.f32.xlu0 %v344
        %v362 = vpop.xlane.xlu0 %361
        %363 = vadd.xlane.f32.xlu0 %v345
        %v364 = vpop.xlane.xlu0 %363
        %365 = vadd.xlane.f32.xlu0 %v346
        %v366 = vpop.xlane.xlu0 %365
        %367 = vadd.xlane.f32.xlu0 %v347
        %v368 = vpop.xlane.xlu0 %367
        %369 = vadd.xlane.f32.xlu0 %v348
        %v370 = vpop.xlane.xlu0 %369
        %371 = vadd.xlane.f32.xlu0 %v349
        %v372 = vpop.xlane.xlu0 %371
        %373 = vadd.xlane.f32.xlu0 %v350
        %v374 = vpop.xlane.xlu0 %373
        %375 = vadd.xlane.f32.xlu0 %v351
        %v376 = vpop.xlane.xlu0 %375
        %377 = vadd.xlane.f32.xlu0 %v352
        %v378 = vpop.xlane.xlu0 %377
        %379 = vadd.xlane.f32.xlu0 %v353
        %v380 = vpop.xlane.xlu0 %379
        %381 = vadd.xlane.f32.xlu0 %v354
        %v382 = vpop.xlane.xlu0 %381
        %383 = vadd.xlane.f32.xlu0 %v355
        %v384 = vpop.xlane.xlu0 %383
        %385 = vadd.xlane.f32.xlu0 %v356
        %v386 = vpop.xlane.xlu0 %385
        %387 = vadd.xlane.f32.xlu0 %v357
        %v388 = vpop.xlane.xlu0 %387
        %389 = vadd.xlane.f32.xlu0 %v358
        %v390 = vpop.xlane.xlu0 %389
        %v391 = vmul.f32 %v312, 0.03125
        %v392 = vmul.f32 %v314, 0.03125
        %v393 = vmul.f32 %v316, 0.03125
        %v394 = vmul.f32 %v318, 0.03125
        %v395 = vmul.f32 %v320, 0.03125
        %v396 = vmul.f32 %v322, 0.03125
        %v397 = vmul.f32 %v324, 0.03125
        %v398 = vmul.f32 %v326, 0.03125
        %v399 = vmul.f32 %v328, 0.03125
        %v400 = vmul.f32 %v330, 0.03125
        %v401 = vmul.f32 %v332, 0.03125
        %v402 = vmul.f32 %v334, 0.03125
        %v403 = vmul.f32 %v336, 0.03125
        %v404 = vmul.f32 %v338, 0.03125
        %v405 = vmul.f32 %v340, 0.03125
        %v406 = vmul.f32 %v342, 0.03125
        %v407 = vmul.f32 %v360, 0.03125
        %v408 = vmul.f32 %v362, 0.03125
        %v409 = vmul.f32 %v364, 0.03125
        %v410 = vmul.f32 %v366, 0.03125
        %v411 = vmul.f32 %v368, 0.03125
        %v412 = vmul.f32 %v370, 0.03125
        %v413 = vmul.f32 %v372, 0.03125
        %v414 = vmul.f32 %v374, 0.03125
        %v415 = vmul.f32 %v376, 0.03125
        %v416 = vmul.f32 %v378, 0.03125
        %v417 = vmul.f32 %v380, 0.03125
        %v418 = vmul.f32 %v382, 0.03125
        %v419 = vmul.f32 %v384, 0.03125
        %v420 = vmul.f32 %v386, 0.03125
        %v421 = vmul.f32 %v388, 0.03125
        %v422 = vmul.f32 %v390, 0.03125
        %v423 = vmul.f32 %v391, %v391
        %v424 = vmul.f32 %v392, %v392
        %v425 = vmul.f32 %v393, %v393
        %v426 = vmul.f32 %v394, %v394
        %v427 = vmul.f32 %v395, %v395
        %v428 = vmul.f32 %v396, %v396
        %v429 = vmul.f32 %v397, %v397
        %v430 = vmul.f32 %v398, %v398
        %v431 = vmul.f32 %v399, %v399
        %v432 = vmul.f32 %v400, %v400
        %v433 = vmul.f32 %v401, %v401
        %v434 = vmul.f32 %v402, %v402
        %v435 = vmul.f32 %v403, %v403
        %v436 = vmul.f32 %v404, %v404
        %v437 = vmul.f32 %v405, %v405
        %v438 = vmul.f32 %v406, %v406
        %v439 = vsub.f32 %v407, %v423
        %v440 = vsub.f32 %v408, %v424
        %v441 = vsub.f32 %v409, %v425
        %v442 = vsub.f32 %v410, %v426
        %v443 = vsub.f32 %v411, %v427
        %v444 = vsub.f32 %v412, %v428
        %v445 = vsub.f32 %v413, %v429
        %v446 = vsub.f32 %v414, %v430
        %v447 = vsub.f32 %v415, %v431
        %v448 = vsub.f32 %v416, %v432
        %v449 = vsub.f32 %v417, %v433
        %v450 = vsub.f32 %v418, %v434
        %v451 = vsub.f32 %v419, %v435
        %v452 = vsub.f32 %v420, %v436
        %v453 = vsub.f32 %v421, %v437
        %v454 = vsub.f32 %v422, %v438
        %v455 = vsub.f32 %v295, %v391
        %v456 = vsub.f32 %v296, %v392
        %v457 = vsub.f32 %v297, %v393
        %v458 = vsub.f32 %v298, %v394
        %v459 = vsub.f32 %v299, %v395
        %v460 = vsub.f32 %v300, %v396
        %v461 = vsub.f32 %v301, %v397
        %v462 = vsub.f32 %v302, %v398
        %v463 = vsub.f32 %v303, %v399
        %v464 = vsub.f32 %v304, %v400
        %v465 = vsub.f32 %v305, %v401
        %v466 = vsub.f32 %v306, %v402
        %v467 = vsub.f32 %v307, %v403
        %v468 = vsub.f32 %v308, %v404
        %v469 = vsub.f32 %v309, %v405
        %v470 = vsub.f32 %v310, %v406
        %v471 = vadd.f32 %v439, 1e-05
        %v472 = vadd.f32 %v440, 1e-05
        %v473 = vadd.f32 %v441, 1e-05
        %v474 = vadd.f32 %v442, 1e-05
        %v475 = vadd.f32 %v443, 1e-05
        %v476 = vadd.f32 %v444, 1e-05
        %v477 = vadd.f32 %v445, 1e-05
        %v478 = vadd.f32 %v446, 1e-05
        %v479 = vadd.f32 %v447, 1e-05
        %v480 = vadd.f32 %v448, 1e-05
        %v481 = vadd.f32 %v449, 1e-05
        %v482 = vadd.f32 %v450, 1e-05
        %v483 = vadd.f32 %v451, 1e-05
        %v484 = vadd.f32 %v452, 1e-05
        %v485 = vadd.f32 %v453, 1e-05
        %v486 = vadd.f32 %v454, 1e-05
        %v487 = vrsqrt.pop %v471
        %v488 = vmul.f32 %v487, %v471
        %v489 = vmul.f32 %v488, %v487
        %v490 = vmul.f32 0.5, %v489
        %v491 = vsub.f32 1.5, %v490
        %v492 = vmul.f32 %v487, %v491
        %vm493 = vweird.f32 %v471
        %vm494 = vweird.f32 %v487
        %vm495 = vmor %vm493, %vm494
        %v496 = vsel %vm495, %v487, %v492
        %v497 = vrsqrt.pop %v472
        %v498 = vmul.f32 %v497, %v472
        %v499 = vmul.f32 %v498, %v497
        %v500 = vmul.f32 0.5, %v499
        %v501 = vsub.f32 1.5, %v500
        %v502 = vmul.f32 %v497, %v501
        %vm503 = vweird.f32 %v472
        %vm504 = vweird.f32 %v497
        %vm505 = vmor %vm503, %vm504
        %v506 = vsel %vm505, %v497, %v502
        %v507 = vrsqrt.pop %v473
        %v508 = vmul.f32 %v507, %v473
        %v509 = vmul.f32 %v508, %v507
        %v510 = vmul.f32 0.5, %v509
        %v511 = vsub.f32 1.5, %v510
        %v512 = vmul.f32 %v507, %v511
        %vm513 = vweird.f32 %v473
        %vm514 = vweird.f32 %v507
        %vm515 = vmor %vm513, %vm514
        %v516 = vsel %vm515, %v507, %v512
        %v517 = vrsqrt.pop %v474
        %v518 = vmul.f32 %v517, %v474
        %v519 = vmul.f32 %v518, %v517
        %v520 = vmul.f32 0.5, %v519
        %v521 = vsub.f32 1.5, %v520
        %v522 = vmul.f32 %v517, %v521
        %vm523 = vweird.f32 %v474
        %vm524 = vweird.f32 %v517
        %vm525 = vmor %vm523, %vm524
        %v526 = vsel %vm525, %v517, %v522
        %v527 = vrsqrt.pop %v475
        %v528 = vmul.f32 %v527, %v475
        %v529 = vmul.f32 %v528, %v527
        %v530 = vmul.f32 0.5, %v529
        %v531 = vsub.f32 1.5, %v530
        %v532 = vmul.f32 %v527, %v531
        %vm533 = vweird.f32 %v475
        %vm534 = vweird.f32 %v527
        %vm535 = vmor %vm533, %vm534
        %v536 = vsel %vm535, %v527, %v532
        %v537 = vrsqrt.pop %v476
        %v538 = vmul.f32 %v537, %v476
        %v539 = vmul.f32 %v538, %v537
        %v540 = vmul.f32 0.5, %v539
        %v541 = vsub.f32 1.5, %v540
        %v542 = vmul.f32 %v537, %v541
        %vm543 = vweird.f32 %v476
        %vm544 = vweird.f32 %v537
        %vm545 = vmor %vm543, %vm544
        %v546 = vsel %vm545, %v537, %v542
        %v547 = vrsqrt.pop %v477
        %v548 = vmul.f32 %v547, %v477
        %v549 = vmul.f32 %v548, %v547
        %v550 = vmul.f32 0.5, %v549
        %v551 = vsub.f32 1.5, %v550
        %v552 = vmul.f32 %v547, %v551
        %vm553 = vweird.f32 %v477
        %vm554 = vweird.f32 %v547
        %vm555 = vmor %vm553, %vm554
        %v556 = vsel %vm555, %v547, %v552
        %v557 = vrsqrt.pop %v478
        %v558 = vmul.f32 %v557, %v478
        %v559 = vmul.f32 %v558, %v557
        %v560 = vmul.f32 0.5, %v559
        %v561 = vsub.f32 1.5, %v560
        %v562 = vmul.f32 %v557, %v561
        %vm563 = vweird.f32 %v478
        %vm564 = vweird.f32 %v557
        %vm565 = vmor %vm563, %vm564
        %v566 = vsel %vm565, %v557, %v562
        %v567 = vrsqrt.pop %v479
        %v568 = vmul.f32 %v567, %v479
        %v569 = vmul.f32 %v568, %v567
        %v570 = vmul.f32 0.5, %v569
        %v571 = vsub.f32 1.5, %v570
        %v572 = vmul.f32 %v567, %v571
        %vm573 = vweird.f32 %v479
        %vm574 = vweird.f32 %v567
        %vm575 = vmor %vm573, %vm574
        %v576 = vsel %vm575, %v567, %v572
        %v577 = vrsqrt.pop %v480
        %v578 = vmul.f32 %v577, %v480
        %v579 = vmul.f32 %v578, %v577
        %v580 = vmul.f32 0.5, %v579
        %v581 = vsub.f32 1.5, %v580
        %v582 = vmul.f32 %v577, %v581
        %vm583 = vweird.f32 %v480
        %vm584 = vweird.f32 %v577
        %vm585 = vmor %vm583, %vm584
        %v586 = vsel %vm585, %v577, %v582
        %v587 = vrsqrt.pop %v481
        %v588 = vmul.f32 %v587, %v481
        %v589 = vmul.f32 %v588, %v587
        %v590 = vmul.f32 0.5, %v589
        %v591 = vsub.f32 1.5, %v590
        %v592 = vmul.f32 %v587, %v591
        %vm593 = vweird.f32 %v481
        %vm594 = vweird.f32 %v587
        %vm595 = vmor %vm593, %vm594
        %v596 = vsel %vm595, %v587, %v592
        %v597 = vrsqrt.pop %v482
        %v598 = vmul.f32 %v597, %v482
        %v599 = vmul.f32 %v598, %v597
        %v600 = vmul.f32 0.5, %v599
        %v601 = vsub.f32 1.5, %v600
        %v602 = vmul.f32 %v597, %v601
        %vm603 = vweird.f32 %v482
        %vm604 = vweird.f32 %v597
        %vm605 = vmor %vm603, %vm604
        %v606 = vsel %vm605, %v597, %v602
        %v607 = vrsqrt.pop %v483
        %v608 = vmul.f32 %v607, %v483
        %v609 = vmul.f32 %v608, %v607
        %v610 = vmul.f32 0.5, %v609
        %v611 = vsub.f32 1.5, %v610
        %v612 = vmul.f32 %v607, %v611
        %vm613 = vweird.f32 %v483
        %vm614 = vweird.f32 %v607
        %vm615 = vmor %vm613, %vm614
        %v616 = vsel %vm615, %v607, %v612
        %v617 = vrsqrt.pop %v484
        %v618 = vmul.f32 %v617, %v484
        %v619 = vmul.f32 %v618, %v617
        %v620 = vmul.f32 0.5, %v619
        %v621 = vsub.f32 1.5, %v620
        %v622 = vmul.f32 %v617, %v621
        %vm623 = vweird.f32 %v484
        %vm624 = vweird.f32 %v617
        %vm625 = vmor %vm623, %vm624
        %v626 = vsel %vm625, %v617, %v622
        %v627 = vrsqrt.pop %v485
        %v628 = vmul.f32 %v627, %v485
        %v629 = vmul.f32 %v628, %v627
        %v630 = vmul.f32 0.5, %v629
        %v631 = vsub.f32 1.5, %v630
        %v632 = vmul.f32 %v627, %v631
        %vm633 = vweird.f32 %v485
        %vm634 = vweird.f32 %v627
        %vm635 = vmor %vm633, %vm634
        %v636 = vsel %vm635, %v627, %v632
        %v637 = vrsqrt.pop %v486
        %v638 = vmul.f32 %v637, %v486
        %v639 = vmul.f32 %v638, %v637
        %v640 = vmul.f32 0.5, %v639
        %v641 = vsub.f32 1.5, %v640
        %v642 = vmul.f32 %v637, %v641
        %vm643 = vweird.f32 %v486
        %vm644 = vweird.f32 %v637
        %vm645 = vmor %vm643, %vm644
        %v646 = vsel %vm645, %v637, %v642
        %v647 = vmul.f32 %v455, %v496
        %v648 = vmul.f32 %v456, %v506
        %v649 = vmul.f32 %v457, %v516
        %v650 = vmul.f32 %v458, %v526
        %v651 = vmul.f32 %v459, %v536
        %v652 = vmul.f32 %v460, %v546
        %v653 = vmul.f32 %v461, %v556
        %v654 = vmul.f32 %v462, %v566
        %v655 = vmul.f32 %v463, %v576
        %v656 = vmul.f32 %v464, %v586
        %v657 = vmul.f32 %v465, %v596
        %v658 = vmul.f32 %v466, %v606
        %v659 = vmul.f32 %v467, %v616
        %v660 = vmul.f32 %v468, %v626
        %v661 = vmul.f32 %v469, %v636
        %v662 = vmul.f32 %v470, %v646
        %v663 = vld [vmem:[#allocation5] sm:$0xff]
        %v664 = vld [vmem:[#allocation5 + $0x8] sm:$0xff]
        %v665 = vld [vmem:[#allocation5 + $0x10] sm:$0xff]
        %v666 = vld [vmem:[#allocation5 + $0x18] sm:$0xff]
        %v667 = vld [vmem:[#allocation5 + $0x20] sm:$0xff]
        %v668 = vld [vmem:[#allocation5 + $0x28] sm:$0xff]
        %v669 = vld [vmem:[#allocation5 + $0x30] sm:$0xff]
        %v670 = vld [vmem:[#allocation5 + $0x38] sm:$0xff]
        %v671 = vld [vmem:[#allocation5 + $0x40] sm:$0xff]
        %v672 = vld [vmem:[#allocation5 + $0x48] sm:$0xff]
        %v673 = vld [vmem:[#allocation5 + $0x50] sm:$0xff]
        %v674 = vld [vmem:[#allocation5 + $0x58] sm:$0xff]
        %v675 = vld [vmem:[#allocation5 + $0x60] sm:$0xff]
        %v676 = vld [vmem:[#allocation5 + $0x68] sm:$0xff]
        %v677 = vld [vmem:[#allocation5 + $0x70] sm:$0xff]
        %v678 = vld [vmem:[#allocation5 + $0x78] sm:$0xff]
        %v679 = vld [vmem:[#allocation7] sm:$0x7]
        %v680 = vperm.slane %v679, 0
        %681 = vmatpush.msra.mxu0 %v678
        %682 = vmatpush.msra.mxu0 %v677
        %683 = vmatpush.msra.mxu0 %v676
        %684 = vmatpush.msra.mxu0 %v675
        %685 = vmatpush.msra.mxu0 %v674
        %686 = vmatpush.msra.mxu0 %v673
        %687 = vmatpush.msra.mxu0 %v672
        %688 = vmatpush.msra.mxu0 %v671
        %689 = vmatpush.msra.mxu0 %v670
        %690 = vmatpush.msra.mxu0 %v669
        %691 = vmatpush.msra.mxu0 %v668
        %692 = vmatpush.msra.mxu0 %v667
        %693 = vmatpush.msra.mxu0 %v666
        %694 = vmatpush.msra.mxu0 %v665
        %695 = vmatpush.msra.mxu0 %v664
        %696 = vmatpush.msra.mxu0 %v663
        %697 = vmatmul.f32.gmra.mxu0 %v647
        %v698 = vpop.f32.mrf.mxu0
        %v699 = vadd.f32 %v680, %v698
        %700 = vmatmul.f32.gmra.mxu0 %v648
        %v701 = vpop.f32.mrf.mxu0
        %v702 = vadd.f32 %v680, %v701
        %703 = vmatmul.f32.gmra.mxu0 %v649
        %v704 = vpop.f32.mrf.mxu0
        %v705 = vadd.f32 %v680, %v704
        %706 = vmatmul.f32.gmra.mxu0 %v650
        %v707 = vpop.f32.mrf.mxu0
        %v708 = vadd.f32 %v680, %v707
        %709 = vmatmul.f32.gmra.mxu0 %v651
        %v710 = vpop.f32.mrf.mxu0
        %v711 = vadd.f32 %v680, %v710
        %712 = vmatmul.f32.gmra.mxu0 %v652
        %v713 = vpop.f32.mrf.mxu0
        %v714 = vadd.f32 %v680, %v713
        %715 = vmatmul.f32.gmra.mxu0 %v653
        %v716 = vpop.f32.mrf.mxu0
        %v717 = vadd.f32 %v680, %v716
        %718 = vmatmul.f32.gmra.mxu0 %v654
        %v719 = vpop.f32.mrf.mxu0
        %v720 = vadd.f32 %v680, %v719
        %721 = vmatmul.f32.gmra.mxu0 %v655
        %v722 = vpop.f32.mrf.mxu0
        %v723 = vadd.f32 %v680, %v722
        %724 = vmatmul.f32.gmra.mxu0 %v656
        %v725 = vpop.f32.mrf.mxu0
        %v726 = vadd.f32 %v680, %v725
        %727 = vmatmul.f32.gmra.mxu0 %v657
        %v728 = vpop.f32.mrf.mxu0
        %v729 = vadd.f32 %v680, %v728
        %730 = vmatmul.f32.gmra.mxu0 %v658
        %v731 = vpop.f32.mrf.mxu0
        %v732 = vadd.f32 %v680, %v731
        %733 = vmatmul.f32.gmra.mxu0 %v659
        %v734 = vpop.f32.mrf.mxu0
        %v735 = vadd.f32 %v680, %v734
        %736 = vmatmul.f32.gmra.mxu0 %v660
        %v737 = vpop.f32.mrf.mxu0
        %v738 = vadd.f32 %v680, %v737
        %739 = vmatmul.f32.gmra.mxu0 %v661
        %v740 = vpop.f32.mrf.mxu0
        %v741 = vadd.f32 %v680, %v740
        %742 = vmatmul.f32.gmra.mxu0 %v662
        %v743 = vpop.f32.mrf.mxu0
        %v744 = vadd.f32 %v680, %v743
        %745 = vdwg.mxu0
        %746 = vadd.xlane.f32.xlu0 %v699
        %v747 = vpop.xlane.xlu0 %746
        %748 = vadd.xlane.f32.xlu0 %v702
        %v749 = vpop.xlane.xlu0 %748
        %750 = vadd.xlane.f32.xlu0 %v705
        %v751 = vpop.xlane.xlu0 %750
        %752 = vadd.xlane.f32.xlu0 %v708
        %v753 = vpop.xlane.xlu0 %752
        %754 = vadd.xlane.f32.xlu0 %v711
        %v755 = vpop.xlane.xlu0 %754
        %756 = vadd.xlane.f32.xlu0 %v714
        %v757 = vpop.xlane.xlu0 %756
        %758 = vadd.xlane.f32.xlu0 %v717
        %v759 = vpop.xlane.xlu0 %758
        %760 = vadd.xlane.f32.xlu0 %v720
        %v761 = vpop.xlane.xlu0 %760
        %762 = vadd.xlane.f32.xlu0 %v723
        %v763 = vpop.xlane.xlu0 %762
        %764 = vadd.xlane.f32.xlu0 %v726
        %v765 = vpop.xlane.xlu0 %764
        %766 = vadd.xlane.f32.xlu0 %v729
        %v767 = vpop.xlane.xlu0 %766
        %768 = vadd.xlane.f32.xlu0 %v732
        %v769 = vpop.xlane.xlu0 %768
        %770 = vadd.xlane.f32.xlu0 %v735
        %v771 = vpop.xlane.xlu0 %770
        %772 = vadd.xlane.f32.xlu0 %v738
        %v773 = vpop.xlane.xlu0 %772
        %774 = vadd.xlane.f32.xlu0 %v741
        %v775 = vpop.xlane.xlu0 %774
        %776 = vadd.xlane.f32.xlu0 %v744
        %v777 = vpop.xlane.xlu0 %776
        %v778 = vmul.f32 %v699, %v699
        %v779 = vmul.f32 %v702, %v702
        %v780 = vmul.f32 %v705, %v705
        %v781 = vmul.f32 %v708, %v708
        %v782 = vmul.f32 %v711, %v711
        %v783 = vmul.f32 %v714, %v714
        %v784 = vmul.f32 %v717, %v717
        %v785 = vmul.f32 %v720, %v720
        %v786 = vmul.f32 %v723, %v723
        %v787 = vmul.f32 %v726, %v726
        %v788 = vmul.f32 %v729, %v729
        %v789 = vmul.f32 %v732, %v732
        %v790 = vmul.f32 %v735, %v735
        %v791 = vmul.f32 %v738, %v738
        %v792 = vmul.f32 %v741, %v741
        %v793 = vmul.f32 %v744, %v744
        %794 = vadd.xlane.f32.xlu0 %v778
        %v795 = vpop.xlane.xlu0 %794
        %796 = vadd.xlane.f32.xlu0 %v779
        %v797 = vpop.xlane.xlu0 %796
        %798 = vadd.xlane.f32.xlu0 %v780
        %v799 = vpop.xlane.xlu0 %798
        %800 = vadd.xlane.f32.xlu0 %v781
        %v801 = vpop.xlane.xlu0 %800
        %802 = vadd.xlane.f32.xlu0 %v782
        %v803 = vpop.xlane.xlu0 %802
        %804 = vadd.xlane.f32.xlu0 %v783
        %v805 = vpop.xlane.xlu0 %804
        %806 = vadd.xlane.f32.xlu0 %v784
        %v807 = vpop.xlane.xlu0 %806
        %808 = vadd.xlane.f32.xlu0 %v785
        %v809 = vpop.xlane.xlu0 %808
        %810 = vadd.xlane.f32.xlu0 %v786
        %v811 = vpop.xlane.xlu0 %810
        %812 = vadd.xlane.f32.xlu0 %v787
        %v813 = vpop.xlane.xlu0 %812
        %814 = vadd.xlane.f32.xlu0 %v788
        %v815 = vpop.xlane.xlu0 %814
        %816 = vadd.xlane.f32.xlu0 %v789
        %v817 = vpop.xlane.xlu0 %816
        %818 = vadd.xlane.f32.xlu0 %v790
        %v819 = vpop.xlane.xlu0 %818
        %820 = vadd.xlane.f32.xlu0 %v791
        %v821 = vpop.xlane.xlu0 %820
        %822 = vadd.xlane.f32.xlu0 %v792
        %v823 = vpop.xlane.xlu0 %822
        %824 = vadd.xlane.f32.xlu0 %v793
        %v825 = vpop.xlane.xlu0 %824
        %v826 = vmul.f32 %v747, 0.015625
        %v827 = vmul.f32 %v749, 0.015625
        %v828 = vmul.f32 %v751, 0.015625
        %v829 = vmul.f32 %v753, 0.015625
        %v830 = vmul.f32 %v755, 0.015625
        %v831 = vmul.f32 %v757, 0.015625
        %v832 = vmul.f32 %v759, 0.015625
        %v833 = vmul.f32 %v761, 0.015625
        %v834 = vmul.f32 %v763, 0.015625
        %v835 = vmul.f32 %v765, 0.015625
        %v836 = vmul.f32 %v767, 0.015625
        %v837 = vmul.f32 %v769, 0.015625
        %v838 = vmul.f32 %v771, 0.015625
        %v839 = vmul.f32 %v773, 0.015625
        %v840 = vmul.f32 %v775, 0.015625
        %v841 = vmul.f32 %v777, 0.015625
        %v842 = vmul.f32 %v795, 0.015625
        %v843 = vmul.f32 %v797, 0.015625
        %v844 = vmul.f32 %v799, 0.015625
        %v845 = vmul.f32 %v801, 0.015625
        %v846 = vmul.f32 %v803, 0.015625
        %v847 = vmul.f32 %v805, 0.015625
        %v848 = vmul.f32 %v807, 0.015625
        %v849 = vmul.f32 %v809, 0.015625
        %v850 = vmul.f32 %v811, 0.015625
        %v851 = vmul.f32 %v813, 0.015625
        %v852 = vmul.f32 %v815, 0.015625
        %v853 = vmul.f32 %v817, 0.015625
        %v854 = vmul.f32 %v819, 0.015625
        %v855 = vmul.f32 %v821, 0.015625
        %v856 = vmul.f32 %v823, 0.015625
        %v857 = vmul.f32 %v825, 0.015625
        %v858 = vmul.f32 %v826, %v826
        %v859 = vmul.f32 %v827, %v827
        %v860 = vmul.f32 %v828, %v828
        %v861 = vmul.f32 %v829, %v829
        %v862 = vmul.f32 %v830, %v830
        %v863 = vmul.f32 %v831, %v831
        %v864 = vmul.f32 %v832, %v832
        %v865 = vmul.f32 %v833, %v833
        %v866 = vmul.f32 %v834, %v834
        %v867 = vmul.f32 %v835, %v835
        %v868 = vmul.f32 %v836, %v836
        %v869 = vmul.f32 %v837, %v837
        %v870 = vmul.f32 %v838, %v838
        %v871 = vmul.f32 %v839, %v839
        %v872 = vmul.f32 %v840, %v840
        %v873 = vmul.f32 %v841, %v841
        %v874 = vsub.f32 %v842, %v858
        %v875 = vsub.f32 %v843, %v859
        %v876 = vsub.f32 %v844, %v860
        %v877 = vsub.f32 %v845, %v861
        %v878 = vsub.f32 %v846, %v862
        %v879 = vsub.f32 %v847, %v863
        %v880 = vsub.f32 %v848, %v864
        %v881 = vsub.f32 %v849, %v865
        %v882 = vsub.f32 %v850, %v866
        %v883 = vsub.f32 %v851, %v867
        %v884 = vsub.f32 %v852, %v868
        %v885 = vsub.f32 %v853, %v869
        %v886 = vsub.f32 %v854, %v870
        %v887 = vsub.f32 %v855, %v871
        %v888 = vsub.f32 %v856, %v872
        %v889 = vsub.f32 %v857, %v873
        %v890 = vsub.f32 %v699, %v826
        %v891 = vsub.f32 %v702, %v827
        %v892 = vsub.f32 %v705, %v828
        %v893 = vsub.f32 %v708, %v829
        %v894 = vsub.f32 %v711, %v830
        %v895 = vsub.f32 %v714, %v831
        %v896 = vsub.f32 %v717, %v832
        %v897 = vsub.f32 %v720, %v833
        %v898 = vsub.f32 %v723, %v834
        %v899 = vsub.f32 %v726, %v835
        %v900 = vsub.f32 %v729, %v836
        %v901 = vsub.f32 %v732, %v837
        %v902 = vsub.f32 %v735, %v838
        %v903 = vsub.f32 %v738, %v839
        %v904 = vsub.f32 %v741, %v840
        %v905 = vsub.f32 %v744, %v841
        %v906 = vadd.f32 %v874, 1e-05
        %v907 = vadd.f32 %v875, 1e-05
        %v908 = vadd.f32 %v876, 1e-05
        %v909 = vadd.f32 %v877, 1e-05
        %v910 = vadd.f32 %v878, 1e-05
        %v911 = vadd.f32 %v879, 1e-05
        %v912 = vadd.f32 %v880, 1e-05
        %v913 = vadd.f32 %v881, 1e-05
        %v914 = vadd.f32 %v882, 1e-05
        %v915 = vadd.f32 %v883, 1e-05
        %v916 = vadd.f32 %v884, 1e-05
        %v917 = vadd.f32 %v885, 1e-05
        %v918 = vadd.f32 %v886, 1e-05
        %v919 = vadd.f32 %v887, 1e-05
        %v920 = vadd.f32 %v888, 1e-05
        %v921 = vadd.f32 %v889, 1e-05
        %v922 = vrsqrt.pop %v906
        %v923 = vmul.f32 %v922, %v906
        %v924 = vmul.f32 %v923, %v922
        %v925 = vmul.f32 0.5, %v924
        %v926 = vsub.f32 1.5, %v925
        %v927 = vmul.f32 %v922, %v926
        %vm928 = vweird.f32 %v906
        %vm929 = vweird.f32 %v922
        %vm930 = vmor %vm928, %vm929
        %v931 = vsel %vm930, %v922, %v927
        %v932 = vrsqrt.pop %v907
        %v933 = vmul.f32 %v932, %v907
        %v934 = vmul.f32 %v933, %v932
        %v935 = vmul.f32 0.5, %v934
        %v936 = vsub.f32 1.5, %v935
        %v937 = vmul.f32 %v932, %v936
        %vm938 = vweird.f32 %v907
        %vm939 = vweird.f32 %v932
        %vm940 = vmor %vm938, %vm939
        %v941 = vsel %vm940, %v932, %v937
        %v942 = vrsqrt.pop %v908
        %v943 = vmul.f32 %v942, %v908
        %v944 = vmul.f32 %v943, %v942
        %v945 = vmul.f32 0.5, %v944
        %v946 = vsub.f32 1.5, %v945
        %v947 = vmul.f32 %v942, %v946
        %vm948 = vweird.f32 %v908
        %vm949 = vweird.f32 %v942
        %vm950 = vmor %vm948, %vm949
        %v951 = vsel %vm950, %v942, %v947
        %v952 = vrsqrt.pop %v909
        %v953 = vmul.f32 %v952, %v909
        %v954 = vmul.f32 %v953, %v952
        %v955 = vmul.f32 0.5, %v954
        %v956 = vsub.f32 1.5, %v955
        %v957 = vmul.f32 %v952, %v956
        %vm958 = vweird.f32 %v909
        %vm959 = vweird.f32 %v952
        %vm960 = vmor %vm958, %vm959
        %v961 = vsel %vm960, %v952, %v957
        %v962 = vrsqrt.pop %v910
        %v963 = vmul.f32 %v962, %v910
        %v964 = vmul.f32 %v963, %v962
        %v965 = vmul.f32 0.5, %v964
        %v966 = vsub.f32 1.5, %v965
        %v967 = vmul.f32 %v962, %v966
        %vm968 = vweird.f32 %v910
        %vm969 = vweird.f32 %v962
        %vm970 = vmor %vm968, %vm969
        %v971 = vsel %vm970, %v962, %v967
        %v972 = vrsqrt.pop %v911
        %v973 = vmul.f32 %v972, %v911
        %v974 = vmul.f32 %v973, %v972
        %v975 = vmul.f32 0.5, %v974
        %v976 = vsub.f32 1.5, %v975
        %v977 = vmul.f32 %v972, %v976
        %vm978 = vweird.f32 %v911
        %vm979 = vweird.f32 %v972
        %vm980 = vmor %vm978, %vm979
        %v981 = vsel %vm980, %v972, %v977
        %v982 = vrsqrt.pop %v912
        %v983 = vmul.f32 %v982, %v912
        %v984 = vmul.f32 %v983, %v982
        %v985 = vmul.f32 0.5, %v984
        %v986 = vsub.f32 1.5, %v985
        %v987 = vmul.f32 %v982, %v986
        %vm988 = vweird.f32 %v912
        %vm989 = vweird.f32 %v982
        %vm990 = vmor %vm988, %vm989
        %v991 = vsel %vm990, %v982, %v987
        %v992 = vrsqrt.pop %v913
        %v993 = vmul.f32 %v992, %v913
        %v994 = vmul.f32 %v993, %v992
        %v995 = vmul.f32 0.5, %v994
        %v996 = vsub.f32 1.5, %v995
        %v997 = vmul.f32 %v992, %v996
        %vm998 = vweird.f32 %v913
        %vm999 = vweird.f32 %v992
        %vm1000 = vmor %vm998, %vm999
        %v1001 = vsel %vm1000, %v992, %v997
        %v1002 = vrsqrt.pop %v914
        %v1003 = vmul.f32 %v1002, %v914
        %v1004 = vmul.f32 %v1003, %v1002
        %v1005 = vmul.f32 0.5, %v1004
        %v1006 = vsub.f32 1.5, %v1005
        %v1007 = vmul.f32 %v1002, %v1006
        %vm1008 = vweird.f32 %v914
        %vm1009 = vweird.f32 %v1002
        %vm1010 = vmor %vm1008, %vm1009
        %v1011 = vsel %vm1010, %v1002, %v1007
        %v1012 = vrsqrt.pop %v915
        %v1013 = vmul.f32 %v1012, %v915
        %v1014 = vmul.f32 %v1013, %v1012
        %v1015 = vmul.f32 0.5, %v1014
        %v1016 = vsub.f32 1.5, %v1015
        %v1017 = vmul.f32 %v1012, %v1016
        %vm1018 = vweird.f32 %v915
        %vm1019 = vweird.f32 %v1012
        %vm1020 = vmor %vm1018, %vm1019
        %v1021 = vsel %vm1020, %v1012, %v1017
        %v1022 = vrsqrt.pop %v916
        %v1023 = vmul.f32 %v1022, %v916
        %v1024 = vmul.f32 %v1023, %v1022
        %v1025 = vmul.f32 0.5, %v1024
        %v1026 = vsub.f32 1.5, %v1025
        %v1027 = vmul.f32 %v1022, %v1026
        %vm1028 = vweird.f32 %v916
        %vm1029 = vweird.f32 %v1022
        %vm1030 = vmor %vm1028, %vm1029
        %v1031 = vsel %vm1030, %v1022, %v1027
        %v1032 = vrsqrt.pop %v917
        %v1033 = vmul.f32 %v1032, %v917
        %v1034 = vmul.f32 %v1033, %v1032
        %v1035 = vmul.f32 0.5, %v1034
        %v1036 = vsub.f32 1.5, %v1035
        %v1037 = vmul.f32 %v1032, %v1036
        %vm1038 = vweird.f32 %v917
        %vm1039 = vweird.f32 %v1032
        %vm1040 = vmor %vm1038, %vm1039
        %v1041 = vsel %vm1040, %v1032, %v1037
        %v1042 = vrsqrt.pop %v918
        %v1043 = vmul.f32 %v1042, %v918
        %v1044 = vmul.f32 %v1043, %v1042
        %v1045 = vmul.f32 0.5, %v1044
        %v1046 = vsub.f32 1.5, %v1045
        %v1047 = vmul.f32 %v1042, %v1046
        %vm1048 = vweird.f32 %v918
        %vm1049 = vweird.f32 %v1042
        %vm1050 = vmor %vm1048, %vm1049
        %v1051 = vsel %vm1050, %v1042, %v1047
        %v1052 = vrsqrt.pop %v919
        %v1053 = vmul.f32 %v1052, %v919
        %v1054 = vmul.f32 %v1053, %v1052
        %v1055 = vmul.f32 0.5, %v1054
        %v1056 = vsub.f32 1.5, %v1055
        %v1057 = vmul.f32 %v1052, %v1056
        %vm1058 = vweird.f32 %v919
        %vm1059 = vweird.f32 %v1052
        %vm1060 = vmor %vm1058, %vm1059
        %v1061 = vsel %vm1060, %v1052, %v1057
        %v1062 = vrsqrt.pop %v920
        %v1063 = vmul.f32 %v1062, %v920
        %v1064 = vmul.f32 %v1063, %v1062
        %v1065 = vmul.f32 0.5, %v1064
        %v1066 = vsub.f32 1.5, %v1065
        %v1067 = vmul.f32 %v1062, %v1066
        %vm1068 = vweird.f32 %v920
        %vm1069 = vweird.f32 %v1062
        %vm1070 = vmor %vm1068, %vm1069
        %v1071 = vsel %vm1070, %v1062, %v1067
        %v1072 = vrsqrt.pop %v921
        %v1073 = vmul.f32 %v1072, %v921
        %v1074 = vmul.f32 %v1073, %v1072
        %v1075 = vmul.f32 0.5, %v1074
        %v1076 = vsub.f32 1.5, %v1075
        %v1077 = vmul.f32 %v1072, %v1076
        %vm1078 = vweird.f32 %v921
        %vm1079 = vweird.f32 %v1072
        %vm1080 = vmor %vm1078, %vm1079
        %v1081 = vsel %vm1080, %v1072, %v1077
        %v1082 = vmul.f32 %v890, %v931
        %v1083 = vmul.f32 %v891, %v941
        %v1084 = vmul.f32 %v892, %v951
        %v1085 = vmul.f32 %v893, %v961
        %v1086 = vmul.f32 %v894, %v971
        %v1087 = vmul.f32 %v895, %v981
        %v1088 = vmul.f32 %v896, %v991
        %v1089 = vmul.f32 %v897, %v1001
        %v1090 = vmul.f32 %v898, %v1011
        %v1091 = vmul.f32 %v899, %v1021
        %v1092 = vmul.f32 %v900, %v1031
        %v1093 = vmul.f32 %v901, %v1041
        %v1094 = vmul.f32 %v902, %v1051
        %v1095 = vmul.f32 %v903, %v1061
        %v1096 = vmul.f32 %v904, %v1071
        %v1097 = vmul.f32 %v905, %v1081
        %v1098 = vperm.slane %v679, 1
        %v1099 = vmul.f32 %v1082, %v1098
        %v1100 = vmul.f32 %v1083, %v1098
        %v1101 = vmul.f32 %v1084, %v1098
        %v1102 = vmul.f32 %v1085, %v1098
        %v1103 = vmul.f32 %v1086, %v1098
        %v1104 = vmul.f32 %v1087, %v1098
        %v1105 = vmul.f32 %v1088, %v1098
        %v1106 = vmul.f32 %v1089, %v1098
        %v1107 = vmul.f32 %v1090, %v1098
        %v1108 = vmul.f32 %v1091, %v1098
        %v1109 = vmul.f32 %v1092, %v1098
        %v1110 = vmul.f32 %v1093, %v1098
        %v1111 = vmul.f32 %v1094, %v1098
        %v1112 = vmul.f32 %v1095, %v1098
        %v1113 = vmul.f32 %v1096, %v1098
        %v1114 = vmul.f32 %v1097, %v1098
        %v1115 = vperm.slane %v679, 2
        %v1116 = vadd.f32 %v1099, %v1115
        %v1117 = vadd.f32 %v1100, %v1115
        %v1118 = vadd.f32 %v1101, %v1115
        %v1119 = vadd.f32 %v1102, %v1115
        %v1120 = vadd.f32 %v1103, %v1115
        %v1121 = vadd.f32 %v1104, %v1115
        %v1122 = vadd.f32 %v1105, %v1115
        %v1123 = vadd.f32 %v1106, %v1115
        %v1124 = vadd.f32 %v1107, %v1115
        %v1125 = vadd.f32 %v1108, %v1115
        %v1126 = vadd.f32 %v1109, %v1115
        %v1127 = vadd.f32 %v1110, %v1115
        %v1128 = vadd.f32 %v1111, %v1115
        %v1129 = vadd.f32 %v1112, %v1115
        %v1130 = vadd.f32 %v1113, %v1115
        %v1131 = vadd.f32 %v1114, %v1115
        %v1132 = vmax.f32 %v1116, 0.0
        %v1133 = vmax.f32 %v1117, 0.0
        %v1134 = vmax.f32 %v1118, 0.0
        %v1135 = vmax.f32 %v1119, 0.0
        %v1136 = vmax.f32 %v1120, 0.0
        %v1137 = vmax.f32 %v1121, 0.0
        %v1138 = vmax.f32 %v1122, 0.0
        %v1139 = vmax.f32 %v1123, 0.0
        %v1140 = vmax.f32 %v1124, 0.0
        %v1141 = vmax.f32 %v1125, 0.0
        %v1142 = vmax.f32 %v1126, 0.0
        %v1143 = vmax.f32 %v1127, 0.0
        %v1144 = vmax.f32 %v1128, 0.0
        %v1145 = vmax.f32 %v1129, 0.0
        %v1146 = vmax.f32 %v1130, 0.0
        %v1147 = vmax.f32 %v1131, 0.0
        %v1148 = vld [vmem:[#allocation8] sm:$0xff]
        %v1149 = vld [vmem:[#allocation8 + $0x8] sm:$0xff]
        %v1150 = vld [vmem:[#allocation8 + $0x10] sm:$0xff]
        %v1151 = vld [vmem:[#allocation8 + $0x18] sm:$0xff]
        %v1152 = vld [vmem:[#allocation8 + $0x20] sm:$0xff]
        %v1153 = vld [vmem:[#allocation8 + $0x28] sm:$0xff]
        %v1154 = vld [vmem:[#allocation8 + $0x30] sm:$0xff]
        %v1155 = vld [vmem:[#allocation8 + $0x38] sm:$0xff]
        %v1156 = vld [vmem:[#allocation8 + $0x40] sm:$0xff]
        %v1157 = vld [vmem:[#allocation8 + $0x48] sm:$0xff]
        %v1158 = vld [vmem:[#allocation8 + $0x50] sm:$0xff]
        %v1159 = vld [vmem:[#allocation8 + $0x58] sm:$0xff]
        %v1160 = vld [vmem:[#allocation8 + $0x60] sm:$0xff]
        %v1161 = vld [vmem:[#allocation8 + $0x68] sm:$0xff]
        %v1162 = vld [vmem:[#allocation8 + $0x70] sm:$0xff]
        %v1163 = vld [vmem:[#allocation8 + $0x78] sm:$0xff]
        %v1164 = vld [vmem:[%s4] sm:$0x1]
        %v1166 = vperm.slane %v1164, 0
        %1168 = vmatpush.msra.mxu0 %v1163
        %1169 = vmatpush.msra.mxu0 %v1162
        %1170 = vmatpush.msra.mxu0 %v1161
        %1171 = vmatpush.msra.mxu0 %v1160
        %1172 = vmatpush.msra.mxu0 %v1159
        %1173 = vmatpush.msra.mxu0 %v1158
        %1174 = vmatpush.msra.mxu0 %v1157
        %1175 = vmatpush.msra.mxu0 %v1156
        %1176 = vmatpush.msra.mxu0 %v1155
        %1177 = vmatpush.msra.mxu0 %v1154
        %1178 = vmatpush.msra.mxu0 %v1153
        %1179 = vmatpush.msra.mxu0 %v1152
        %1180 = vmatpush.msra.mxu0 %v1151
        %1181 = vmatpush.msra.mxu0 %v1150
        %1182 = vmatpush.msra.mxu0 %v1149
        %1183 = vmatpush.msra.mxu0 %v1148
        %1184 = vmatmul.f32.gmra.mxu0 %v1132
        %v1185 = vpop.f32.mrf.mxu0
        %v1186 = vadd.f32 %v1166, %v1185
        %1187 = vmatmul.f32.gmra.mxu0 %v1133
        %v1188 = vpop.f32.mrf.mxu0
        %v1189 = vadd.f32 %v1166, %v1188
        %1190 = vmatmul.f32.gmra.mxu0 %v1134
        %v1191 = vpop.f32.mrf.mxu0
        %v1192 = vadd.f32 %v1166, %v1191
        %1193 = vmatmul.f32.gmra.mxu0 %v1135
        %v1194 = vpop.f32.mrf.mxu0
        %v1195 = vadd.f32 %v1166, %v1194
        %1196 = vmatmul.f32.gmra.mxu0 %v1136
        %v1197 = vpop.f32.mrf.mxu0
        %v1198 = vadd.f32 %v1166, %v1197
        %1199 = vmatmul.f32.gmra.mxu0 %v1137
        %v1200 = vpop.f32.mrf.mxu0
        %v1201 = vadd.f32 %v1166, %v1200
        %1202 = vmatmul.f32.gmra.mxu0 %v1138
        %v1203 = vpop.f32.mrf.mxu0
        %v1204 = vadd.f32 %v1166, %v1203
        %1205 = vmatmul.f32.gmra.mxu0 %v1139
        %v1206 = vpop.f32.mrf.mxu0
        %v1207 = vadd.f32 %v1166, %v1206
        %1208 = vmatmul.f32.gmra.mxu0 %v1140
        %v1209 = vpop.f32.mrf.mxu0
        %v1210 = vadd.f32 %v1166, %v1209
        %1211 = vmatmul.f32.gmra.mxu0 %v1141
        %v1212 = vpop.f32.mrf.mxu0
        %v1213 = vadd.f32 %v1166, %v1212
        %1214 = vmatmul.f32.gmra.mxu0 %v1142
        %v1215 = vpop.f32.mrf.mxu0
        %v1216 = vadd.f32 %v1166, %v1215
        %1217 = vmatmul.f32.gmra.mxu0 %v1143
        %v1218 = vpop.f32.mrf.mxu0
        %v1219 = vadd.f32 %v1166, %v1218
        %1220 = vmatmul.f32.gmra.mxu0 %v1144
        %v1221 = vpop.f32.mrf.mxu0
        %v1222 = vadd.f32 %v1166, %v1221
        %1223 = vmatmul.f32.gmra.mxu0 %v1145
        %v1224 = vpop.f32.mrf.mxu0
        %v1225 = vadd.f32 %v1166, %v1224
        %1226 = vmatmul.f32.gmra.mxu0 %v1146
        %v1227 = vpop.f32.mrf.mxu0
        %v1228 = vadd.f32 %v1166, %v1227
        %1229 = vmatmul.f32.gmra.mxu0 %v1147
        %v1230 = vpop.f32.mrf.mxu0
        %v1231 = vadd.f32 %v1166, %v1230
        %1232 = vdwg.mxu0
        %1233 = vst [vmem:[%s292] sm:$0xff] %v1186
        %1234 = vst [vmem:[%s292 + $0x8] sm:$0xff] %v1189
        %1235 = vst [vmem:[%s292 + $0x10] sm:$0xff] %v1192
        %1236 = vst [vmem:[%s292 + $0x18] sm:$0xff] %v1195
        %1237 = vst [vmem:[%s292 + $0x20] sm:$0xff] %v1198
        %1238 = vst [vmem:[%s292 + $0x28] sm:$0xff] %v1201
        %1239 = vst [vmem:[%s292 + $0x30] sm:$0xff] %v1204
        %1240 = vst [vmem:[%s292 + $0x38] sm:$0xff] %v1207
        %1241 = vst [vmem:[%s292 + $0x40] sm:$0xff] %v1210
        %1242 = vst [vmem:[%s292 + $0x48] sm:$0xff] %v1213
        %1243 = vst [vmem:[%s292 + $0x50] sm:$0xff] %v1216
        %1244 = vst [vmem:[%s292 + $0x58] sm:$0xff] %v1219
        %1245 = vst [vmem:[%s292 + $0x60] sm:$0xff] %v1222
        %1246 = vst [vmem:[%s292 + $0x68] sm:$0xff] %v1225
        %1247 = vst [vmem:[%s292 + $0x70] sm:$0xff] %v1228
        %1248 = vst [vmem:[%s292 + $0x78] sm:$0xff] %v1231
        %s1249 = sand.u32 %s142, 1
        %s1250 = scalar_lea.sflag [#allocation4], %s1249
        %s1251 = sand.u32 %s142, 1
        %s1252 = smul.addr %s1251, 128
        %s1253 = scalar_lea.vmem [#allocation10], %s1252
        // Predicated region
        $region57: #{tpu_custom_call.1} parent=39 // pred_check
          %p1254 = pneg %p152
        $region58: #{tpu_custom_call.1} parent=39 // pred_check_branch
          %1256 = sbr.rel (%p1254) target = $region60
        $region59: #{tpu_custom_call.1} parent=39 // pred_region
          %s1257 = smul.u32 16, %s24
          %1259 = vsyncadd %s1250, 0
          %s1260 = smul.addr %s1257, 8
          %s1261 = scalar_lea.hbm %s5, %s1260
          %s1262 = sshll.u32 %s1253, 4
          %s1263 = int_to_ptr.vmem [resolvable:$true] %s1262
          %s1264 = sshll.u32 %s1261, 4
          %s1265 = int_to_ptr.hbm [resolvable:$true] %s1264
          %1270 = dma.vmem_to_hbm [thread:$0]  %s1263, 2048, %s1265, %s1250, 128, 128, 8
        $region60: #{tpu_custom_call.1} parent=39 // pred_fallthru
          _
      $region40: #{tpu_custom_call.1} parent=5 // pred_fallthru
        _
      %p1271 = scmp.le.s32.totalorder 2, %s19
      // Predicated region
      $region61: #{tpu_custom_call.1} parent=5 // pred_check
        %p1272 = pneg %p1271
      $region62: #{tpu_custom_call.1} parent=5 // pred_check_branch
        %1274 = sbr.rel (%p1272) target = $region64
      $region63: #{tpu_custom_call.1} parent=5 // pred_region
        %s1275 = ssub.s32 %s19, 2
        // Predicated region
        $region65: #{tpu_custom_call.1} parent=63 // pred_check
          %p1276 = pneg %p158
        $region66: #{tpu_custom_call.1} parent=63 // pred_check_branch
          %1278 = sbr.rel (%p1276) target = $region68
        $region67: #{tpu_custom_call.1} parent=63 // pred_region
          %s1279 = sand.u32 %s143, 1
          %s1280 = scalar_lea.sflag [#allocation4], %s1279
          %s1281 = sand.u32 %s143, 1
          %s1282 = smul.addr %s1281, 128
          %s1283 = scalar_lea.vmem [#allocation10], %s1282
          %1285 = dma.done %s1280, 2048
        $region68: #{tpu_custom_call.1} parent=63 // pred_fallthru
          _
      $region64: #{tpu_custom_call.1} parent=5 // pred_fallthru
        _
    $region6: #{tpu_custom_call.1} parent=1 // loop_footer
      %s23 = sadd.s32 1, %s19
    $region7: #{tpu_custom_call.1} parent=1 // loop_footer_branch
      %18 = sbr.rel target = $region3
    $region8: #{tpu_custom_call.1} parent=1 // loop_exit
      _
    %1286 = vsyncpa [#allocation3], 1
    %s1287 = scalar_lea.sflag [#allocation3], 1
    %1288 = vsyncpa %s1287, 1
    %1289 = vsyncpa [#allocation6], 1
    %1290 = vsyncpa [#allocation9], 1
    %1291 = vsyncpa [#allocation4], 1
    %s1292 = scalar_lea.sflag [#allocation4], 1
    %1293 = vsyncpa %s1292, 1

</llo_original>
